<compile_context>
chip_gen: v7x
topology: tpu7x:2x2x1
jax: 0.10.0
libtpu: 0.0.40
codegen_flags: <defaults>
</compile_context>

<pallas_src>
import jax
import jax.numpy as jnp
from jax.experimental import pallas as pl
from jax.experimental.pallas import tpu as pltpu


def _nconv_kernel(x_ref, a_ref, o_ref):
    # x_ref: (bm, W) tile, a_ref: (W, Np) resident, o_ref: (bm, Np) tile.
    o_ref[...] = jnp.dot(
        x_ref[...], a_ref[...], preferred_element_type=jnp.float32
    ).astype(o_ref.dtype)


def _round_up(a: int, b: int) -> int:
    return ((a + b - 1) // b) * b


def _vmem_capacity_bytes() -> int:
    try:
        cap = int(pltpu.get_tpu_info().vmem_capacity_bytes)
        if cap > 0:
            return cap
    except Exception:
        pass
    return 64 << 20  # conservative: exact on v7x, a safe lower bound on v5e/v6e


def nconv(x, A, *, block_m=None, force_pallas=False):
    """x: (C, L, W), A: (V, W) -> (C, L, V).  Matches einsum('clw,vw->clv')."""
    C, L, W = x.shape
    V, W2 = A.shape
    assert W == W2, "contraction dim mismatch"
    M = C * L

    # Small-problem fast path: at these sizes the kernel is pure launch overhead.
    if not force_pallas and M * W * V < (1 << 18):
        return jnp.einsum("clw,vw->clv", x, A)

    x2 = x.reshape(M, W)   # row-major fusion of (C, L) -> M
    a_t = A.T              # (W, V): one transpose outside the hot loop

    # ---- N (=V) padding policy -------------------------------------------
    LANE = 128
    if V % LANE == 0:
        Np = V
    else:
        nxt = _round_up(V, LANE)
        # Pad only when overhead is small (<~25%); otherwise keep masked stores.
        Np = nxt if 4 * V >= 3 * nxt else V
    if Np != V:
        a_t = jnp.pad(a_t, ((0, 0), (0, Np - V)))

    # ---- M tile selection (generation-aware VMEM budget) -------------------
    x_item = jnp.dtype(x.dtype).itemsize
    a_item = jnp.dtype(a_t.dtype).itemsize
    o_item = x_item
    sub = max(8, 32 // x_item)  # sublane tile: f32 -> 8, bf16 -> 16, int8 -> 32

    vmem_cap = _vmem_capacity_bytes()
    vmem_limit = (min(vmem_cap, 128 << 20) * 3) // 4   # 48 MiB on v7x, 96 MiB on v5e/v6e
    budget = (vmem_limit * 3) // 5                     # headroom for MXU scratch / misc

    def _footprint(b):  # double-buffered input/output tiles + resident RHS
        return 2 * b * W * x_item + 2 * W * Np * a_item + 2 * b * Np * o_item

    bm = 4096 if block_m is None else int(block_m)
    bm = min(bm, _round_up(M, sub))
    bm = max(sub, (bm // sub) * sub)
    while bm > 128 and _footprint(bm) > budget:
        bm //= 2
    bm = max(sub, (bm // sub) * sub)
    # v7x megacore: give the "parallel" M axis at least two blocks to split across TCs.
    if pl.cdiv(M, bm) < 2 and M >= 256:
        bm = max(128, _round_up(pl.cdiv(M, 2), sub))

    grid_m = pl.cdiv(M, bm)

    call_kwargs = {}
    cp_cls = getattr(pltpu, "CompilerParams", None) or getattr(
        pltpu, "TPUCompilerParams", None
    )
    if cp_cls is not None:
        call_kwargs["compiler_params"] = cp_cls(
            dimension_semantics=("parallel",),
            vmem_limit_bytes=int(vmem_limit),
        )
    ce_cls = getattr(pl, "CostEstimate", None)
    if ce_cls is not None:
        call_kwargs["cost_estimate"] = ce_cls(
            flops=2 * M * W * V,
            bytes_accessed=x_item * M * W + a_item * W * Np + o_item * M * Np,
            transcendentals=0,
        )

    out = pl.pallas_call(
        _nconv_kernel,
        out_shape=jax.ShapeDtypeStruct((M, Np), x.dtype),
        grid=(grid_m,),
        in_specs=[
            pl.BlockSpec((bm, W), lambda i: (i, 0)),   # K = full W (no wrapper pad)
            pl.BlockSpec((W, Np), lambda i: (0, 0)),   # resident RHS (DMA'd once)
        ],
        out_specs=pl.BlockSpec((bm, Np), lambda i: (i, 0)),
        **call_kwargs,
    )(x2, a_t)

    if Np != V:
        out = out[:, :V]
    return out.reshape(C, L, V)


def _quantized_normal(key, shape, dtype=jnp.float32):
    # Values exactly representable in bf16 (multiples of 1/8) so MXU pass-count /
    # precision differences cannot perturb the comparison with the reference.
    return jnp.round(jax.random.normal(key, shape, dtype=dtype) * 8.0) / 8.0


if __name__ == "__main__":
    key = jax.random.PRNGKey(0)
    kx, ka, kx2, ka2, kx3, ka3 = jax.random.split(key, 6)

    # 1) Medium shape exercising the Pallas path (M = C*L = 1024, >=2 M blocks,
    #    V stays un-padded -> masked-store branch).
    C, L, W, V = 4, 256, 32, 32
    x = _quantized_normal(kx, (C, L, W))
    A = _quantized_normal(ka, (V, W))
    out = jax.block_until_ready(nconv(x, A, force_pallas=True))
    ref = jnp.einsum("clw,vw->clv", x, A, precision=jax.lax.Precision.HIGHEST)
    assert out.shape == (C, L, V)
    assert jnp.allclose(out, ref, atol=1e-5, rtol=1e-5)

    # 2) V within ~25% of a lane multiple -> padded-N + slice branch.
    C2, L2, W2, V2 = 2, 64, 16, 100
    x2 = _quantized_normal(kx2, (C2, L2, W2))
    A2 = _quantized_normal(ka2, (V2, W2))
    out2 = jax.block_until_ready(nconv(x2, A2, force_pallas=True))
    ref2 = jnp.einsum("clw,vw->clv", x2, A2, precision=jax.lax.Precision.HIGHEST)
    assert out2.shape == (C2, L2, V2)
    assert jnp.allclose(out2, ref2, atol=1e-5, rtol=1e-5)

    # 3) Tiny shape: default auto path (einsum fallback) and forced Pallas path.
    C3, L3, W3, V3 = 4, 16, 8, 8
    x3 = _quantized_normal(kx3, (C3, L3, W3))
    A3 = _quantized_normal(ka3, (V3, W3))
    ref3 = jnp.einsum("clw,vw->clv", x3, A3, precision=jax.lax.Precision.HIGHEST)
    out3a = jax.block_until_ready(nconv(x3, A3))                       # fallback
    out3b = jax.block_until_ready(nconv(x3, A3, force_pallas=True))    # pallas
    assert out3a.shape == (C3, L3, V3) and out3b.shape == (C3, L3, V3)
    assert jnp.allclose(out3a, ref3, atol=1e-5, rtol=1e-5)
    assert jnp.allclose(out3b, ref3, atol=1e-5, rtol=1e-5)

    print("KERNEL_OK")
</pallas_src>

<mosaic_0001>
module attributes {stable_mosaic.version = 11 : i64} {
  func.func @_nconv_kernel(%arg0: i32, %arg1: memref<512x32xf32, #tpu.memory_space<vmem>>, %arg2: memref<32x32xf32, #tpu.memory_space<vmem>>, %arg3: memref<512x32xf32, #tpu.memory_space<vmem>>) attributes {dimension_semantics = [#tpu.dimension_semantics<parallel>], iteration_bounds = array<i64: 2>, scalar_prefetch = 0 : i64, scratch_operands = 0 : i64, tpu.core_type = #tpu.core_type<tc>, window_params = [{transform_indices = @transform_0, window_bounds = array<i64: 512, 32>}, {pipeline_mode = #tpu.pipeline_mode<synchronous>, transform_indices = @transform_1, window_bounds = array<i64: 32, 32>}, {transform_indices = @transform_2, window_bounds = array<i64: 512, 32>}]} {
    %c0 = arith.constant 0 : index
    %c0_0 = arith.constant 0 : index
    %0 = vector.load %arg1[%c0, %c0_0] : memref<512x32xf32, #tpu.memory_space<vmem>>, vector<512x32xf32>
    %c0_1 = arith.constant 0 : index
    %c0_2 = arith.constant 0 : index
    %1 = vector.load %arg2[%c0_1, %c0_2] : memref<32x32xf32, #tpu.memory_space<vmem>>, vector<32x32xf32>
    %cst = arith.constant dense<0.000000e+00> : vector<512x32xf32>
    %2 = tpu.matmul %0, %1, %cst {dimension_numbers = #tpu.dot_dimension_numbers<[1], [0], [0], [1], [0, 0, 1, 1], [], []>} : vector<512x32xf32>, vector<32x32xf32>, vector<512x32xf32> -> vector<512x32xf32>
    %c0_3 = arith.constant 0 : index
    %c0_4 = arith.constant 0 : index
    %3 = vector.load %arg3[%c0_3, %c0_4] : memref<512x32xf32, #tpu.memory_space<vmem>>, vector<512x32xf32>
    tpu.vector_store %arg3[%c0_3, %c0_4], %2 {strides = array<i32>} : memref<512x32xf32, #tpu.memory_space<vmem>>, vector<512x32xf32>,
    return
  }
  func.func @transform_0(%arg0: i32) -> (i32, i32) {
    %c0_i32 = arith.constant 0 : i32
    %c0_i32_0 = arith.constant 0 : i32
    return %arg0, %c0_i32 : i32, i32
  }
  func.func @transform_1(%arg0: i32) -> (i32, i32) {
    %c0_i32 = arith.constant 0 : i32
    %c0_i32_0 = arith.constant 0 : i32
    %c0_i32_1 = arith.constant 0 : i32
    return %c0_i32, %c0_i32_0 : i32, i32
  }
  func.func @transform_2(%arg0: i32) -> (i32, i32) {
    %c0_i32 = arith.constant 0 : i32
    %c0_i32_0 = arith.constant 0 : i32
    return %arg0, %c0_i32 : i32, i32
  }
}

</mosaic_0001>

<llo_original>
// kernel: tpu_custom_call.1
$region0: #{tpu_custom_call.1}
  #allocation0 [shape = 'u32[]', space=smem, size = 0x4, offset = 0x4, fixed_abs, tag = 'smem constant byte address 0x4 - core index']
  #allocation1 [shape = 'u32[144,128]{1,0:T(1,128)}', space=vmem, size = 0x12000, scoped, tag = 'internal scratch']
  %s0 = inlined_call_operand.vmem [shape: f32[1024,32], index: 0, kind: input, shape index: {}]
  %s1 = inlined_call_operand.vmem [shape: f32[32,32], index: 1, kind: input, shape index: {}]
  %s2 = inlined_call_operand.vmem [shape: f32[1024,32], index: 2, kind: output, shape index: {}]
  %s3 = sld [smem:[#allocation0]]
  $region41: #{tpu_custom_call.1} parent=0
    _
  %s5 = ssub.s32 1, %s3
  %s6 = scalar_select 0, %s5, %s3
  loop: start=0, step=1, limit=4
  $region2: #{tpu_custom_call.1} parent=0 // loop_pre_header
    _
  $region3: #{tpu_custom_call.1} parent=0 // loop_header
    %s8 = sphi 0, %s12
    %p9 = scmp.ge.s32.totalorder %s8, 4
    %s18 = sphi 0, %s20
    %s21 = sphi 0, %s18
    %s22 = sphi 0, %s21
    %s38 = sphi 0, %s22
    %s42 = sphi 0, %s42
    %s44 = sphi 0, %s42
    %s45 = sphi 0, %s44
    %s59 = sphi 0, %s45
    %s65 = sphi 0, %s67
    %s68 = sphi 0, %s65
    %s69 = sphi 0, %s68
    %s85 = sphi 0, %s69
  $region4: #{tpu_custom_call.1} parent=0 // loop_header_branch
    %11 = sbr.rel (%p9) target = $region8
  $region5: #{tpu_custom_call.1} parent=0 // loop_body
    %s13 = ssub.s32 %s8, 1
    %s14 = ssub.s32 %s8, 2
    %s15 = sadd.s32 %s8, 1
    %s16 = ssub.s32 %s8, %s15
    %p17 = scmp.eq.s32.totalorder %s16, 0
    %s19 = sadd.s32 %s18, 1
    %s20 = scalar_select %p17, %s18, %s19
    %p23 = pneg %p17
    %p24 = scmp.eq.s32.totalorder %s8, 1
    %p25 = por %p23, %p24
    %p26 = scmp.ne.s32.totalorder %s18, %s21
    %p27 = scmp.eq.s32.totalorder %s8, 0
    %p28 = por %p26, %p27
    %p29 = scmp.ne.s32.totalorder %s18, %s21
    %p30 = scmp.eq.s32.totalorder %s13, 1
    %p31 = por %p29, %p30
    %p32 = scmp.ne.s32.totalorder %s21, %s22
    %p33 = scmp.eq.s32.totalorder %s13, 0
    %p34 = por %p32, %p33
    %p35 = scmp.ne.s32.totalorder %s21, %s22
    %p36 = scmp.eq.s32.totalorder %s14, 1
    %p37 = por %p35, %p36
    %p39 = scmp.ne.s32.totalorder %s22, %s38
    %p40 = scmp.eq.s32.totalorder %s14, 0
    %p41 = por %p39, %p40
    %s43 = sadd.s32 %s42, 1
    %p46 = scmp.eq.s32.totalorder %s8, 1
    %p47 = scmp.ne.s32.totalorder %s42, %s44
    %p48 = scmp.eq.s32.totalorder %s8, 0
    %p49 = por %p47, %p48
    %p50 = scmp.ne.s32.totalorder %s42, %s44
    %p51 = scmp.eq.s32.totalorder %s13, 1
    %p52 = por %p50, %p51
    %p53 = scmp.ne.s32.totalorder %s44, %s45
    %p54 = scmp.eq.s32.totalorder %s13, 0
    %p55 = por %p53, %p54
    %p56 = scmp.ne.s32.totalorder %s44, %s45
    %p57 = scmp.eq.s32.totalorder %s14, 1
    %p58 = por %p56, %p57
    %p60 = scmp.ne.s32.totalorder %s45, %s59
    %p61 = scmp.eq.s32.totalorder %s14, 0
    %p62 = por %p60, %p61
    %s63 = ssub.s32 %s8, %s15
    %p64 = scmp.eq.s32.totalorder %s63, 0
    %s66 = sadd.s32 %s65, 1
    %s67 = scalar_select %p64, %s65, %s66
    %p70 = pneg %p64
    %p71 = scmp.eq.s32.totalorder %s8, 1
    %p72 = por %p70, %p71
    %p73 = scmp.ne.s32.totalorder %s65, %s68
    %p74 = scmp.eq.s32.totalorder %s8, 0
    %p75 = por %p73, %p74
    %p76 = scmp.ne.s32.totalorder %s65, %s68
    %p77 = scmp.eq.s32.totalorder %s13, 1
    %p78 = por %p76, %p77
    %p79 = scmp.ne.s32.totalorder %s68, %s69
    %p80 = scmp.eq.s32.totalorder %s13, 0
    %p81 = por %p79, %p80
    %p82 = scmp.ne.s32.totalorder %s68, %s69
    %p83 = scmp.eq.s32.totalorder %s14, 1
    %p84 = por %p82, %p83
    %p86 = scmp.ne.s32.totalorder %s69, %s85
    %p87 = scmp.eq.s32.totalorder %s14, 0
    %p88 = por %p86, %p87
    %p89 = scmp.le.s32.totalorder 1, %s8
    %p90 = scmp.lt.s32.totalorder %s8, 3
    %p91 = pnand %p89, %p90
    %p92 = pneg %p91
    // Predicated region
    $region9: #{tpu_custom_call.1} parent=5 // pred_check
      _
    $region10: #{tpu_custom_call.1} parent=5 // pred_check_branch
      %94 = sbr.rel (%p91) target = $region12
    $region11: #{tpu_custom_call.1} parent=5 // pred_region
      %s95 = ssub.s32 %s8, 1
      // Predicated region
      $region13: #{tpu_custom_call.1} parent=11 // pred_check
        %p96 = pneg %p55
      $region14: #{tpu_custom_call.1} parent=11 // pred_check_branch
        %98 = sbr.rel (%p96) target = $region16
      $region15: #{tpu_custom_call.1} parent=11 // pred_region
        _
      $region16: #{tpu_custom_call.1} parent=11 // pred_fallthru
        _
    $region12: #{tpu_custom_call.1} parent=5 // pred_fallthru
      _
    %p99 = scmp.lt.s32.totalorder %s8, 2
    // Predicated region
    $region17: #{tpu_custom_call.1} parent=5 // pred_check
      %p100 = pneg %p99
    $region18: #{tpu_custom_call.1} parent=5 // pred_check_branch
      %102 = sbr.rel (%p100) target = $region20
    $region19: #{tpu_custom_call.1} parent=5 // pred_region
      // Predicated region
      $region21: #{tpu_custom_call.1} parent=19 // pred_check
        %p103 = pneg %p28
      $region22: #{tpu_custom_call.1} parent=19 // pred_check_branch
        %105 = sbr.rel (%p103) target = $region24
      $region23: #{tpu_custom_call.1} parent=19 // pred_region
        %s106 = smul.u32 64, %s8
        %p107 = scmp.lt.s32.totalorder %s106, 127
        %s108 = scalar_select %p107, %s106, 127
        %s109 = smul.addr %s108, 8
        %s110 = scalar_lea.vmem %s0, %s109
        %s111 = smul.u32 64, %s8
      $region24: #{tpu_custom_call.1} parent=19 // pred_fallthru
        _
    $region20: #{tpu_custom_call.1} parent=5 // pred_fallthru
      _
    %p112 = scmp.le.s32.totalorder 1, %s8
    %p113 = scmp.lt.s32.totalorder %s8, 3
    %p114 = pnand %p112, %p113
    %p115 = pneg %p114
    // Predicated region
    $region25: #{tpu_custom_call.1} parent=5 // pred_check
      _
    $region26: #{tpu_custom_call.1} parent=5 // pred_check_branch
      %117 = sbr.rel (%p114) target = $region28
    $region27: #{tpu_custom_call.1} parent=5 // pred_region
      %s118 = ssub.s32 %s8, 1
      %s119 = smul.u32 64, %s13
      %p120 = scmp.lt.s32.totalorder %s119, 127
      %s121 = scalar_select %p120, %s119, 127
      %s122 = smul.addr %s121, 8
      %s123 = scalar_lea.vmem %s0, %s122
      %p124 = pneg %p34
      %p125 = pneg %p31
      %p126 = pneg %p55
      %p127 = pneg %p52
      %p128 = pneg %p81
      %p129 = pneg %p78
      %s130 = smul.u32 64, %s13
      %p131 = scmp.lt.s32.totalorder %s130, 127
      %s132 = scalar_select %p131, %s130, 127
      %s133 = smul.addr %s132, 8
      %s134 = scalar_lea.vmem %s2, %s133
      %s135 = smul.u32 64, %s13
      %p136 = scmp.lt.s32.totalorder %s135, 127
      %s137 = scalar_select %p136, %s135, 127
      %s138 = smul.addr %s137, 8
      %s139 = scalar_lea.vmem %s0, %s138
      %s140 = smul.u32 64, %s13
      %s141 = smul.u32 64, %s13
      %p142 = scmp.lt.s32.totalorder %s141, 127
      %s143 = scalar_select %p142, %s141, 127
      %s144 = smul.addr %s143, 8
      %s145 = scalar_lea.vmem %s2, %s144
      %s146 = smul.u32 64, %s13
      %v147 = vld [vmem:[%s139] sm:$0xff]
      %v148 = vld [vmem:[%s139 + $0x8] sm:$0xff]
      %v149 = vld [vmem:[%s139 + $0x10] sm:$0xff]
      %v150 = vld [vmem:[%s139 + $0x18] sm:$0xff]
      %v151 = vld [vmem:[%s139 + $0x20] sm:$0xff]
      %v152 = vld [vmem:[%s139 + $0x28] sm:$0xff]
      %v153 = vld [vmem:[%s139 + $0x30] sm:$0xff]
      %v154 = vld [vmem:[%s139 + $0x38] sm:$0xff]
      %v155 = vld [vmem:[%s139 + $0x40] sm:$0xff]
      %v156 = vld [vmem:[%s139 + $0x48] sm:$0xff]
      %v157 = vld [vmem:[%s139 + $0x50] sm:$0xff]
      %v158 = vld [vmem:[%s139 + $0x58] sm:$0xff]
      %v159 = vld [vmem:[%s139 + $0x60] sm:$0xff]
      %v160 = vld [vmem:[%s139 + $0x68] sm:$0xff]
      %v161 = vld [vmem:[%s139 + $0x70] sm:$0xff]
      %v162 = vld [vmem:[%s139 + $0x78] sm:$0xff]
      %v163 = vld [vmem:[%s139 + $0x80] sm:$0xff]
      %v164 = vld [vmem:[%s139 + $0x88] sm:$0xff]
      %v165 = vld [vmem:[%s139 + $0x90] sm:$0xff]
      %v166 = vld [vmem:[%s139 + $0x98] sm:$0xff]
      %v167 = vld [vmem:[%s139 + $0xa0] sm:$0xff]
      %v168 = vld [vmem:[%s139 + $0xa8] sm:$0xff]
      %v169 = vld [vmem:[%s139 + $0xb0] sm:$0xff]
      %v170 = vld [vmem:[%s139 + $0xb8] sm:$0xff]
      %v171 = vld [vmem:[%s139 + $0xc0] sm:$0xff]
      %v172 = vld [vmem:[%s139 + $0xc8] sm:$0xff]
      %v173 = vld [vmem:[%s139 + $0xd0] sm:$0xff]
      %v174 = vld [vmem:[%s139 + $0xd8] sm:$0xff]
      %v175 = vld [vmem:[%s139 + $0xe0] sm:$0xff]
      %v176 = vld [vmem:[%s139 + $0xe8] sm:$0xff]
      %v177 = vld [vmem:[%s139 + $0xf0] sm:$0xff]
      %v178 = vld [vmem:[%s139 + $0xf8] sm:$0xff]
      %v179 = vld [vmem:[%s139 + $0x100] sm:$0xff]
      %v180 = vld [vmem:[%s139 + $0x108] sm:$0xff]
      %v181 = vld [vmem:[%s139 + $0x110] sm:$0xff]
      %v182 = vld [vmem:[%s139 + $0x118] sm:$0xff]
      %v183 = vld [vmem:[%s139 + $0x120] sm:$0xff]
      %v184 = vld [vmem:[%s139 + $0x128] sm:$0xff]
      %v185 = vld [vmem:[%s139 + $0x130] sm:$0xff]
      %v186 = vld [vmem:[%s139 + $0x138] sm:$0xff]
      %v187 = vld [vmem:[%s139 + $0x140] sm:$0xff]
      %v188 = vld [vmem:[%s139 + $0x148] sm:$0xff]
      %v189 = vld [vmem:[%s139 + $0x150] sm:$0xff]
      %v190 = vld [vmem:[%s139 + $0x158] sm:$0xff]
      %v191 = vld [vmem:[%s139 + $0x160] sm:$0xff]
      %v192 = vld [vmem:[%s139 + $0x168] sm:$0xff]
      %v193 = vld [vmem:[%s139 + $0x170] sm:$0xff]
      %v194 = vld [vmem:[%s139 + $0x178] sm:$0xff]
      %v195 = vld [vmem:[%s139 + $0x180] sm:$0xff]
      %v196 = vld [vmem:[%s139 + $0x188] sm:$0xff]
      %v197 = vld [vmem:[%s139 + $0x190] sm:$0xff]
      %v198 = vld [vmem:[%s139 + $0x198] sm:$0xff]
      %v199 = vld [vmem:[%s139 + $0x1a0] sm:$0xff]
      %v200 = vld [vmem:[%s139 + $0x1a8] sm:$0xff]
      %v201 = vld [vmem:[%s139 + $0x1b0] sm:$0xff]
      %v202 = vld [vmem:[%s139 + $0x1b8] sm:$0xff]
      %v203 = vld [vmem:[%s139 + $0x1c0] sm:$0xff]
      %v204 = vld [vmem:[%s139 + $0x1c8] sm:$0xff]
      %v205 = vld [vmem:[%s139 + $0x1d0] sm:$0xff]
      %v206 = vld [vmem:[%s139 + $0x1d8] sm:$0xff]
      %v207 = vld [vmem:[%s139 + $0x1e0] sm:$0xff]
      %v208 = vld [vmem:[%s139 + $0x1e8] sm:$0xff]
      %v209 = vld [vmem:[%s139 + $0x1f0] sm:$0xff]
      %v210 = vld [vmem:[%s139 + $0x1f8] sm:$0xff]
      %v211 = vld [vmem:[%s1] sm:$0xff]
      %v212 = vld [vmem:[%s1 + $0x8] sm:$0xff]
      %v213 = vld [vmem:[%s1 + $0x10] sm:$0xff]
      %v214 = vld [vmem:[%s1 + $0x18] sm:$0xff]
      %vm215 = vcmask 261120
      %v217 = vsel %vm215, %v147, 0
      %v220 = vsel %vm215, %v148, 0
      %v223 = vsel %vm215, %v149, 0
      %v226 = vsel %vm215, %v150, 0
      %v229 = vsel %vm215, %v151, 0
      %v232 = vsel %vm215, %v152, 0
      %v235 = vsel %vm215, %v153, 0
      %v238 = vsel %vm215, %v154, 0
      %v241 = vsel %vm215, %v155, 0
      %v244 = vsel %vm215, %v156, 0
      %v247 = vsel %vm215, %v157, 0
      %v250 = vsel %vm215, %v158, 0
      %v253 = vsel %vm215, %v159, 0
      %v256 = vsel %vm215, %v160, 0
      %v259 = vsel %vm215, %v161, 0
      %v262 = vsel %vm215, %v162, 0
      %v265 = vsel %vm215, %v163, 0
      %v268 = vsel %vm215, %v164, 0
      %v271 = vsel %vm215, %v165, 0
      %v274 = vsel %vm215, %v166, 0
      %v277 = vsel %vm215, %v167, 0
      %v280 = vsel %vm215, %v168, 0
      %v283 = vsel %vm215, %v169, 0
      %v286 = vsel %vm215, %v170, 0
      %v289 = vsel %vm215, %v171, 0
      %v292 = vsel %vm215, %v172, 0
      %v295 = vsel %vm215, %v173, 0
      %v298 = vsel %vm215, %v174, 0
      %v301 = vsel %vm215, %v175, 0
      %v304 = vsel %vm215, %v176, 0
      %v307 = vsel %vm215, %v177, 0
      %v310 = vsel %vm215, %v178, 0
      %v313 = vsel %vm215, %v179, 0
      %v316 = vsel %vm215, %v180, 0
      %v319 = vsel %vm215, %v181, 0
      %v322 = vsel %vm215, %v182, 0
      %v325 = vsel %vm215, %v183, 0
      %v328 = vsel %vm215, %v184, 0
      %v331 = vsel %vm215, %v185, 0
      %v334 = vsel %vm215, %v186, 0
      %v337 = vsel %vm215, %v187, 0
      %v340 = vsel %vm215, %v188, 0
      %v343 = vsel %vm215, %v189, 0
      %v346 = vsel %vm215, %v190, 0
      %v349 = vsel %vm215, %v191, 0
      %v352 = vsel %vm215, %v192, 0
      %v355 = vsel %vm215, %v193, 0
      %v358 = vsel %vm215, %v194, 0
      %v361 = vsel %vm215, %v195, 0
      %v364 = vsel %vm215, %v196, 0
      %v367 = vsel %vm215, %v197, 0
      %v370 = vsel %vm215, %v198, 0
      %v373 = vsel %vm215, %v199, 0
      %v376 = vsel %vm215, %v200, 0
      %v379 = vsel %vm215, %v201, 0
      %v382 = vsel %vm215, %v202, 0
      %v385 = vsel %vm215, %v203, 0
      %v388 = vsel %vm215, %v204, 0
      %v391 = vsel %vm215, %v205, 0
      %v394 = vsel %vm215, %v206, 0
      %v397 = vsel %vm215, %v207, 0
      %v400 = vsel %vm215, %v208, 0
      %v403 = vsel %vm215, %v209, 0
      %v406 = vsel %vm215, %v210, 0
      %408 = vmatprep.subr.mxu0 0.0
      %409 = vmatpush1.msra.mxu0 %v211
      %410 = vmatprep.subr.mxu0 0.0
      %411 = vmatpush1.msra.mxu0 %v212
      %412 = vmatprep.subr.mxu0 0.0
      %413 = vmatpush1.msra.mxu0 %v213
      %414 = vmatprep.subr.mxu0 0.0
      %415 = vmatpush1.msra.mxu0 %v214
      %416 = vmatprep.subr.mxu0 0.0
      %417 = vmatpush1.msra.mxu0 0.0
      %418 = vmatprep.subr.mxu0 0.0
      %419 = vmatpush1.msra.mxu0 0.0
      %420 = vmatprep.subr.mxu0 0.0
      %421 = vmatpush1.msra.mxu0 0.0
      %422 = vmatprep.subr.mxu0 0.0
      %423 = vmatpush1.msra.mxu0 0.0
      %424 = vmatprep.subr.mxu0 0.0
      %425 = vmatpush1.msra.mxu0 0.0
      %426 = vmatprep.subr.mxu0 0.0
      %427 = vmatpush1.msra.mxu0 0.0
      %428 = vmatprep.subr.mxu0 0.0
      %429 = vmatpush1.msra.mxu0 0.0
      %430 = vmatprep.subr.mxu0 0.0
      %431 = vmatpush1.msra.mxu0 0.0
      %432 = vmatprep.subr.mxu0 0.0
      %433 = vmatpush1.msra.mxu0 0.0
      %434 = vmatprep.subr.mxu0 0.0
      %435 = vmatpush1.msra.mxu0 0.0
      %436 = vmatprep.subr.mxu0 0.0
      %437 = vmatpush1.msra.mxu0 0.0
      %438 = vmatprep.subr.mxu0 0.0
      %439 = vmatpush1.msra.mxu0 0.0
      %440 = vmatprep.subr.mxu0 0.0
      %441 = vmatpush1.msra.mxu0 0.0
      %442 = vmatprep.subr.mxu0 0.0
      %443 = vmatpush1.msra.mxu0 0.0
      %444 = vmatprep.subr.mxu0 0.0
      %445 = vmatpush1.msra.mxu0 0.0
      %446 = vmatprep.subr.mxu0 0.0
      %447 = vmatpush1.msra.mxu0 0.0
      %448 = vmatprep.subr.mxu0 0.0
      %449 = vmatpush1.msra.mxu0 0.0
      %450 = vmatprep.subr.mxu0 0.0
      %451 = vmatpush1.msra.mxu0 0.0
      %452 = vmatprep.subr.mxu0 0.0
      %453 = vmatpush1.msra.mxu0 0.0
      %454 = vmatprep.subr.mxu0 0.0
      %455 = vmatpush1.msra.mxu0 0.0
      %456 = vmatprep.subr.mxu0 0.0
      %457 = vmatpush1.msra.mxu0 0.0
      %458 = vmatprep.subr.mxu0 0.0
      %459 = vmatpush1.msra.mxu0 0.0
      %460 = vmatprep.subr.mxu0 0.0
      %461 = vmatpush1.msra.mxu0 0.0
      %462 = vmatprep.subr.mxu0 0.0
      %463 = vmatpush1.msra.mxu0 0.0
      %464 = vmatprep.subr.mxu0 0.0
      %465 = vmatpush1.msra.mxu0 0.0
      %466 = vmatprep.subr.mxu0 0.0
      %467 = vmatpush1.msra.mxu0 0.0
      %468 = vmatprep.subr.mxu0 0.0
      %469 = vmatpush1.msra.mxu0 0.0
      %470 = vmatprep.subr.mxu0 0.0
      %471 = vmatpush1.msra.mxu0 0.0
      %472 = vmatprep.mubr.f32.mxu0 0.0
      %473 = vmatmul.mubr.f32.gmra.mrb[0].mxu0 %v217
      %v474 = vpop.f32.mrb[0].mxu0
      %v475 = vadd.f32 0.0, %v474
      %v476 = vpop.f32.mrb[0].mxu0
      %477 = vmatprep.mubr.f32.mxu0 0.0
      %478 = vmatmul.mubr.f32.gmra.mrb[0].mxu0 %v220
      %v479 = vpop.f32.mrb[0].mxu0
      %v480 = vadd.f32 0.0, %v479
      %v481 = vpop.f32.mrb[0].mxu0
      %482 = vmatprep.mubr.f32.mxu0 0.0
      %483 = vmatmul.mubr.f32.gmra.mrb[0].mxu0 %v223
      %v484 = vpop.f32.mrb[0].mxu0
      %v485 = vadd.f32 0.0, %v484
      %v486 = vpop.f32.mrb[0].mxu0
      %487 = vmatprep.mubr.f32.mxu0 0.0
      %488 = vmatmul.mubr.f32.gmra.mrb[0].mxu0 %v226
      %v489 = vpop.f32.mrb[0].mxu0
      %v490 = vadd.f32 0.0, %v489
      %v491 = vpop.f32.mrb[0].mxu0
      %492 = vmatprep.mubr.f32.mxu0 0.0
      %493 = vmatmul.mubr.f32.gmra.mrb[0].mxu0 %v229
      %v494 = vpop.f32.mrb[0].mxu0
      %v495 = vadd.f32 0.0, %v494
      %v496 = vpop.f32.mrb[0].mxu0
      %497 = vmatprep.mubr.f32.mxu0 0.0
      %498 = vmatmul.mubr.f32.gmra.mrb[0].mxu0 %v232
      %v499 = vpop.f32.mrb[0].mxu0
      %v500 = vadd.f32 0.0, %v499
      %v501 = vpop.f32.mrb[0].mxu0
      %502 = vmatprep.mubr.f32.mxu0 0.0
      %503 = vmatmul.mubr.f32.gmra.mrb[0].mxu0 %v235
      %v504 = vpop.f32.mrb[0].mxu0
      %v505 = vadd.f32 0.0, %v504
      %v506 = vpop.f32.mrb[0].mxu0
      %507 = vmatprep.mubr.f32.mxu0 0.0
      %508 = vmatmul.mubr.f32.gmra.mrb[0].mxu0 %v238
      %v509 = vpop.f32.mrb[0].mxu0
      %v510 = vadd.f32 0.0, %v509
      %v511 = vpop.f32.mrb[0].mxu0
      %512 = vmatprep.mubr.f32.mxu0 0.0
      %513 = vmatmul.mubr.f32.gmra.mrb[0].mxu0 %v241
      %v514 = vpop.f32.mrb[0].mxu0
      %v515 = vadd.f32 0.0, %v514
      %v516 = vpop.f32.mrb[0].mxu0
      %517 = vmatprep.mubr.f32.mxu0 0.0
      %518 = vmatmul.mubr.f32.gmra.mrb[0].mxu0 %v244
      %v519 = vpop.f32.mrb[0].mxu0
      %v520 = vadd.f32 0.0, %v519
      %v521 = vpop.f32.mrb[0].mxu0
      %522 = vmatprep.mubr.f32.mxu0 0.0
      %523 = vmatmul.mubr.f32.gmra.mrb[0].mxu0 %v247
      %v524 = vpop.f32.mrb[0].mxu0
      %v525 = vadd.f32 0.0, %v524
      %v526 = vpop.f32.mrb[0].mxu0
      %527 = vmatprep.mubr.f32.mxu0 0.0
      %528 = vmatmul.mubr.f32.gmra.mrb[0].mxu0 %v250
      %v529 = vpop.f32.mrb[0].mxu0
      %v530 = vadd.f32 0.0, %v529
      %v531 = vpop.f32.mrb[0].mxu0
      %532 = vmatprep.mubr.f32.mxu0 0.0
      %533 = vmatmul.mubr.f32.gmra.mrb[0].mxu0 %v253
      %v534 = vpop.f32.mrb[0].mxu0
      %v535 = vadd.f32 0.0, %v534
      %v536 = vpop.f32.mrb[0].mxu0
      %537 = vmatprep.mubr.f32.mxu0 0.0
      %538 = vmatmul.mubr.f32.gmra.mrb[0].mxu0 %v256
      %v539 = vpop.f32.mrb[0].mxu0
      %v540 = vadd.f32 0.0, %v539
      %v541 = vpop.f32.mrb[0].mxu0
      %542 = vmatprep.mubr.f32.mxu0 0.0
      %543 = vmatmul.mubr.f32.gmra.mrb[0].mxu0 %v259
      %v544 = vpop.f32.mrb[0].mxu0
      %v545 = vadd.f32 0.0, %v544
      %v546 = vpop.f32.mrb[0].mxu0
      %547 = vmatprep.mubr.f32.mxu0 0.0
      %548 = vmatmul.mubr.f32.gmra.mrb[0].mxu0 %v262
      %v549 = vpop.f32.mrb[0].mxu0
      %v550 = vadd.f32 0.0, %v549
      %v551 = vpop.f32.mrb[0].mxu0
      %552 = vmatprep.mubr.f32.mxu0 0.0
      %553 = vmatmul.mubr.f32.gmra.mrb[0].mxu0 %v265
      %v554 = vpop.f32.mrb[0].mxu0
      %v555 = vadd.f32 0.0, %v554
      %v556 = vpop.f32.mrb[0].mxu0
      %557 = vmatprep.mubr.f32.mxu0 0.0
      %558 = vmatmul.mubr.f32.gmra.mrb[0].mxu0 %v268
      %v559 = vpop.f32.mrb[0].mxu0
      %v560 = vadd.f32 0.0, %v559
      %v561 = vpop.f32.mrb[0].mxu0
      %562 = vmatprep.mubr.f32.mxu0 0.0
      %563 = vmatmul.mubr.f32.gmra.mrb[0].mxu0 %v271
      %v564 = vpop.f32.mrb[0].mxu0
      %v565 = vadd.f32 0.0, %v564
      %v566 = vpop.f32.mrb[0].mxu0
      %567 = vmatprep.mubr.f32.mxu0 0.0
      %568 = vmatmul.mubr.f32.gmra.mrb[0].mxu0 %v274
      %v569 = vpop.f32.mrb[0].mxu0
      %v570 = vadd.f32 0.0, %v569
      %v571 = vpop.f32.mrb[0].mxu0
      %572 = vmatprep.mubr.f32.mxu0 0.0
      %573 = vmatmul.mubr.f32.gmra.mrb[0].mxu0 %v277
      %v574 = vpop.f32.mrb[0].mxu0
      %v575 = vadd.f32 0.0, %v574
      %v576 = vpop.f32.mrb[0].mxu0
      %577 = vmatprep.mubr.f32.mxu0 0.0
      %578 = vmatmul.mubr.f32.gmra.mrb[0].mxu0 %v280
      %v579 = vpop.f32.mrb[0].mxu0
      %v580 = vadd.f32 0.0, %v579
      %v581 = vpop.f32.mrb[0].mxu0
      %582 = vmatprep.mubr.f32.mxu0 0.0
      %583 = vmatmul.mubr.f32.gmra.mrb[0].mxu0 %v283
      %v584 = vpop.f32.mrb[0].mxu0
      %v585 = vadd.f32 0.0, %v584
      %v586 = vpop.f32.mrb[0].mxu0
      %587 = vmatprep.mubr.f32.mxu0 0.0
      %588 = vmatmul.mubr.f32.gmra.mrb[0].mxu0 %v286
      %v589 = vpop.f32.mrb[0].mxu0
      %v590 = vadd.f32 0.0, %v589
      %v591 = vpop.f32.mrb[0].mxu0
      %592 = vmatprep.mubr.f32.mxu0 0.0
      %593 = vmatmul.mubr.f32.gmra.mrb[0].mxu0 %v289
      %v594 = vpop.f32.mrb[0].mxu0
      %v595 = vadd.f32 0.0, %v594
      %v596 = vpop.f32.mrb[0].mxu0
      %597 = vmatprep.mubr.f32.mxu0 0.0
      %598 = vmatmul.mubr.f32.gmra.mrb[0].mxu0 %v292
      %v599 = vpop.f32.mrb[0].mxu0
      %v600 = vadd.f32 0.0, %v599
      %v601 = vpop.f32.mrb[0].mxu0
      %602 = vmatprep.mubr.f32.mxu0 0.0
      %603 = vmatmul.mubr.f32.gmra.mrb[0].mxu0 %v295
      %v604 = vpop.f32.mrb[0].mxu0
      %v605 = vadd.f32 0.0, %v604
      %v606 = vpop.f32.mrb[0].mxu0
      %607 = vmatprep.mubr.f32.mxu0 0.0
      %608 = vmatmul.mubr.f32.gmra.mrb[0].mxu0 %v298
      %v609 = vpop.f32.mrb[0].mxu0
      %v610 = vadd.f32 0.0, %v609
      %v611 = vpop.f32.mrb[0].mxu0
      %612 = vmatprep.mubr.f32.mxu0 0.0
      %613 = vmatmul.mubr.f32.gmra.mrb[0].mxu0 %v301
      %v614 = vpop.f32.mrb[0].mxu0
      %v615 = vadd.f32 0.0, %v614
      %v616 = vpop.f32.mrb[0].mxu0
      %617 = vmatprep.mubr.f32.mxu0 0.0
      %618 = vmatmul.mubr.f32.gmra.mrb[0].mxu0 %v304
      %v619 = vpop.f32.mrb[0].mxu0
      %v620 = vadd.f32 0.0, %v619
      %v621 = vpop.f32.mrb[0].mxu0
      %622 = vmatprep.mubr.f32.mxu0 0.0
      %623 = vmatmul.mubr.f32.gmra.mrb[0].mxu0 %v307
      %v624 = vpop.f32.mrb[0].mxu0
      %v625 = vadd.f32 0.0, %v624
      %v626 = vpop.f32.mrb[0].mxu0
      %627 = vmatprep.mubr.f32.mxu0 0.0
      %628 = vmatmul.mubr.f32.gmra.mrb[0].mxu0 %v310
      %v629 = vpop.f32.mrb[0].mxu0
      %v630 = vadd.f32 0.0, %v629
      %v631 = vpop.f32.mrb[0].mxu0
      %632 = vmatprep.mubr.f32.mxu0 0.0
      %633 = vmatmul.mubr.f32.gmra.mrb[0].mxu0 %v313
      %v634 = vpop.f32.mrb[0].mxu0
      %v635 = vadd.f32 0.0, %v634
      %v636 = vpop.f32.mrb[0].mxu0
      %637 = vmatprep.mubr.f32.mxu0 0.0
      %638 = vmatmul.mubr.f32.gmra.mrb[0].mxu0 %v316
      %v639 = vpop.f32.mrb[0].mxu0
      %v640 = vadd.f32 0.0, %v639
      %v641 = vpop.f32.mrb[0].mxu0
      %642 = vmatprep.mubr.f32.mxu0 0.0
      %643 = vmatmul.mubr.f32.gmra.mrb[0].mxu0 %v319
      %v644 = vpop.f32.mrb[0].mxu0
      %v645 = vadd.f32 0.0, %v644
      %v646 = vpop.f32.mrb[0].mxu0
      %647 = vmatprep.mubr.f32.mxu0 0.0
      %648 = vmatmul.mubr.f32.gmra.mrb[0].mxu0 %v322
      %v649 = vpop.f32.mrb[0].mxu0
      %v650 = vadd.f32 0.0, %v649
      %v651 = vpop.f32.mrb[0].mxu0
      %652 = vmatprep.mubr.f32.mxu0 0.0
      %653 = vmatmul.mubr.f32.gmra.mrb[0].mxu0 %v325
      %v654 = vpop.f32.mrb[0].mxu0
      %v655 = vadd.f32 0.0, %v654
      %v656 = vpop.f32.mrb[0].mxu0
      %657 = vmatprep.mubr.f32.mxu0 0.0
      %658 = vmatmul.mubr.f32.gmra.mrb[0].mxu0 %v328
      %v659 = vpop.f32.mrb[0].mxu0
      %v660 = vadd.f32 0.0, %v659
      %v661 = vpop.f32.mrb[0].mxu0
      %662 = vmatprep.mubr.f32.mxu0 0.0
      %663 = vmatmul.mubr.f32.gmra.mrb[0].mxu0 %v331
      %v664 = vpop.f32.mrb[0].mxu0
      %v665 = vadd.f32 0.0, %v664
      %v666 = vpop.f32.mrb[0].mxu0
      %667 = vmatprep.mubr.f32.mxu0 0.0
      %668 = vmatmul.mubr.f32.gmra.mrb[0].mxu0 %v334
      %v669 = vpop.f32.mrb[0].mxu0
      %v670 = vadd.f32 0.0, %v669
      %v671 = vpop.f32.mrb[0].mxu0
      %672 = vmatprep.mubr.f32.mxu0 0.0
      %673 = vmatmul.mubr.f32.gmra.mrb[0].mxu0 %v337
      %v674 = vpop.f32.mrb[0].mxu0
      %v675 = vadd.f32 0.0, %v674
      %v676 = vpop.f32.mrb[0].mxu0
      %677 = vmatprep.mubr.f32.mxu0 0.0
      %678 = vmatmul.mubr.f32.gmra.mrb[0].mxu0 %v340
      %v679 = vpop.f32.mrb[0].mxu0
      %v680 = vadd.f32 0.0, %v679
      %v681 = vpop.f32.mrb[0].mxu0
      %682 = vmatprep.mubr.f32.mxu0 0.0
      %683 = vmatmul.mubr.f32.gmra.mrb[0].mxu0 %v343
      %v684 = vpop.f32.mrb[0].mxu0
      %v685 = vadd.f32 0.0, %v684
      %v686 = vpop.f32.mrb[0].mxu0
      %687 = vmatprep.mubr.f32.mxu0 0.0
      %688 = vmatmul.mubr.f32.gmra.mrb[0].mxu0 %v346
      %v689 = vpop.f32.mrb[0].mxu0
      %v690 = vadd.f32 0.0, %v689
      %v691 = vpop.f32.mrb[0].mxu0
      %692 = vmatprep.mubr.f32.mxu0 0.0
      %693 = vmatmul.mubr.f32.gmra.mrb[0].mxu0 %v349
      %v694 = vpop.f32.mrb[0].mxu0
      %v695 = vadd.f32 0.0, %v694
      %v696 = vpop.f32.mrb[0].mxu0
      %697 = vmatprep.mubr.f32.mxu0 0.0
      %698 = vmatmul.mubr.f32.gmra.mrb[0].mxu0 %v352
      %v699 = vpop.f32.mrb[0].mxu0
      %v700 = vadd.f32 0.0, %v699
      %v701 = vpop.f32.mrb[0].mxu0
      %702 = vmatprep.mubr.f32.mxu0 0.0
      %703 = vmatmul.mubr.f32.gmra.mrb[0].mxu0 %v355
      %v704 = vpop.f32.mrb[0].mxu0
      %v705 = vadd.f32 0.0, %v704
      %v706 = vpop.f32.mrb[0].mxu0
      %707 = vmatprep.mubr.f32.mxu0 0.0
      %708 = vmatmul.mubr.f32.gmra.mrb[0].mxu0 %v358
      %v709 = vpop.f32.mrb[0].mxu0
      %v710 = vadd.f32 0.0, %v709
      %v711 = vpop.f32.mrb[0].mxu0
      %712 = vmatprep.mubr.f32.mxu0 0.0
      %713 = vmatmul.mubr.f32.gmra.mrb[0].mxu0 %v361
      %v714 = vpop.f32.mrb[0].mxu0
      %v715 = vadd.f32 0.0, %v714
      %v716 = vpop.f32.mrb[0].mxu0
      %717 = vmatprep.mubr.f32.mxu0 0.0
      %718 = vmatmul.mubr.f32.gmra.mrb[0].mxu0 %v364
      %v719 = vpop.f32.mrb[0].mxu0
      %v720 = vadd.f32 0.0, %v719
      %v721 = vpop.f32.mrb[0].mxu0
      %722 = vmatprep.mubr.f32.mxu0 0.0
      %723 = vmatmul.mubr.f32.gmra.mrb[0].mxu0 %v367
      %v724 = vpop.f32.mrb[0].mxu0
      %v725 = vadd.f32 0.0, %v724
      %v726 = vpop.f32.mrb[0].mxu0
      %727 = vmatprep.mubr.f32.mxu0 0.0
      %728 = vmatmul.mubr.f32.gmra.mrb[0].mxu0 %v370
      %v729 = vpop.f32.mrb[0].mxu0
      %v730 = vadd.f32 0.0, %v729
      %v731 = vpop.f32.mrb[0].mxu0
      %732 = vmatprep.mubr.f32.mxu0 0.0
      %733 = vmatmul.mubr.f32.gmra.mrb[0].mxu0 %v373
      %v734 = vpop.f32.mrb[0].mxu0
      %v735 = vadd.f32 0.0, %v734
      %v736 = vpop.f32.mrb[0].mxu0
      %737 = vmatprep.mubr.f32.mxu0 0.0
      %738 = vmatmul.mubr.f32.gmra.mrb[0].mxu0 %v376
      %v739 = vpop.f32.mrb[0].mxu0
      %v740 = vadd.f32 0.0, %v739
      %v741 = vpop.f32.mrb[0].mxu0
      %742 = vmatprep.mubr.f32.mxu0 0.0
      %743 = vmatmul.mubr.f32.gmra.mrb[0].mxu0 %v379
      %v744 = vpop.f32.mrb[0].mxu0
      %v745 = vadd.f32 0.0, %v744
      %v746 = vpop.f32.mrb[0].mxu0
      %747 = vmatprep.mubr.f32.mxu0 0.0
      %748 = vmatmul.mubr.f32.gmra.mrb[0].mxu0 %v382
      %v749 = vpop.f32.mrb[0].mxu0
      %v750 = vadd.f32 0.0, %v749
      %v751 = vpop.f32.mrb[0].mxu0
      %752 = vmatprep.mubr.f32.mxu0 0.0
      %753 = vmatmul.mubr.f32.gmra.mrb[0].mxu0 %v385
      %v754 = vpop.f32.mrb[0].mxu0
      %v755 = vadd.f32 0.0, %v754
      %v756 = vpop.f32.mrb[0].mxu0
      %757 = vmatprep.mubr.f32.mxu0 0.0
      %758 = vmatmul.mubr.f32.gmra.mrb[0].mxu0 %v388
      %v759 = vpop.f32.mrb[0].mxu0
      %v760 = vadd.f32 0.0, %v759
      %v761 = vpop.f32.mrb[0].mxu0
      %762 = vmatprep.mubr.f32.mxu0 0.0
      %763 = vmatmul.mubr.f32.gmra.mrb[0].mxu0 %v391
      %v764 = vpop.f32.mrb[0].mxu0
      %v765 = vadd.f32 0.0, %v764
      %v766 = vpop.f32.mrb[0].mxu0
      %767 = vmatprep.mubr.f32.mxu0 0.0
      %768 = vmatmul.mubr.f32.gmra.mrb[0].mxu0 %v394
      %v769 = vpop.f32.mrb[0].mxu0
      %v770 = vadd.f32 0.0, %v769
      %v771 = vpop.f32.mrb[0].mxu0
      %772 = vmatprep.mubr.f32.mxu0 0.0
      %773 = vmatmul.mubr.f32.gmra.mrb[0].mxu0 %v397
      %v774 = vpop.f32.mrb[0].mxu0
      %v775 = vadd.f32 0.0, %v774
      %v776 = vpop.f32.mrb[0].mxu0
      %777 = vmatprep.mubr.f32.mxu0 0.0
      %778 = vmatmul.mubr.f32.gmra.mrb[0].mxu0 %v400
      %v779 = vpop.f32.mrb[0].mxu0
      %v780 = vadd.f32 0.0, %v779
      %v781 = vpop.f32.mrb[0].mxu0
      %782 = vmatprep.mubr.f32.mxu0 0.0
      %783 = vmatmul.mubr.f32.gmra.mrb[0].mxu0 %v403
      %v784 = vpop.f32.mrb[0].mxu0
      %v785 = vadd.f32 0.0, %v784
      %v786 = vpop.f32.mrb[0].mxu0
      %787 = vmatprep.mubr.f32.mxu0 0.0
      %788 = vmatmul.mubr.f32.gmra.mrb[0].mxu0 %v406
      %v789 = vpop.f32.mrb[0].mxu0
      %v790 = vadd.f32 0.0, %v789
      %v791 = vpop.f32.mrb[0].mxu0
      %792 = vdwg.mxu0
      %793 = vst.msk [vmem:[%s145] sm:$0xff] %vm215, %v475
      %794 = vst.msk [vmem:[%s145 + $0x8] sm:$0xff] %vm215, %v480
      %795 = vst.msk [vmem:[%s145 + $0x10] sm:$0xff] %vm215, %v485
      %796 = vst.msk [vmem:[%s145 + $0x18] sm:$0xff] %vm215, %v490
      %797 = vst.msk [vmem:[%s145 + $0x20] sm:$0xff] %vm215, %v495
      %798 = vst.msk [vmem:[%s145 + $0x28] sm:$0xff] %vm215, %v500
      %799 = vst.msk [vmem:[%s145 + $0x30] sm:$0xff] %vm215, %v505
      %800 = vst.msk [vmem:[%s145 + $0x38] sm:$0xff] %vm215, %v510
      %801 = vst.msk [vmem:[%s145 + $0x40] sm:$0xff] %vm215, %v515
      %802 = vst.msk [vmem:[%s145 + $0x48] sm:$0xff] %vm215, %v520
      %803 = vst.msk [vmem:[%s145 + $0x50] sm:$0xff] %vm215, %v525
      %804 = vst.msk [vmem:[%s145 + $0x58] sm:$0xff] %vm215, %v530
      %805 = vst.msk [vmem:[%s145 + $0x60] sm:$0xff] %vm215, %v535
      %806 = vst.msk [vmem:[%s145 + $0x68] sm:$0xff] %vm215, %v540
      %807 = vst.msk [vmem:[%s145 + $0x70] sm:$0xff] %vm215, %v545
      %808 = vst.msk [vmem:[%s145 + $0x78] sm:$0xff] %vm215, %v550
      %809 = vst.msk [vmem:[%s145 + $0x80] sm:$0xff] %vm215, %v555
      %810 = vst.msk [vmem:[%s145 + $0x88] sm:$0xff] %vm215, %v560
      %811 = vst.msk [vmem:[%s145 + $0x90] sm:$0xff] %vm215, %v565
      %812 = vst.msk [vmem:[%s145 + $0x98] sm:$0xff] %vm215, %v570
      %813 = vst.msk [vmem:[%s145 + $0xa0] sm:$0xff] %vm215, %v575
      %814 = vst.msk [vmem:[%s145 + $0xa8] sm:$0xff] %vm215, %v580
      %815 = vst.msk [vmem:[%s145 + $0xb0] sm:$0xff] %vm215, %v585
      %816 = vst.msk [vmem:[%s145 + $0xb8] sm:$0xff] %vm215, %v590
      %817 = vst.msk [vmem:[%s145 + $0xc0] sm:$0xff] %vm215, %v595
      %818 = vst.msk [vmem:[%s145 + $0xc8] sm:$0xff] %vm215, %v600
      %819 = vst.msk [vmem:[%s145 + $0xd0] sm:$0xff] %vm215, %v605
      %820 = vst.msk [vmem:[%s145 + $0xd8] sm:$0xff] %vm215, %v610
      %821 = vst.msk [vmem:[%s145 + $0xe0] sm:$0xff] %vm215, %v615
      %822 = vst.msk [vmem:[%s145 + $0xe8] sm:$0xff] %vm215, %v620
      %823 = vst.msk [vmem:[%s145 + $0xf0] sm:$0xff] %vm215, %v625
      %824 = vst.msk [vmem:[%s145 + $0xf8] sm:$0xff] %vm215, %v630
      %825 = vst.msk [vmem:[%s145 + $0x100] sm:$0xff] %vm215, %v635
      %826 = vst.msk [vmem:[%s145 + $0x108] sm:$0xff] %vm215, %v640
      %827 = vst.msk [vmem:[%s145 + $0x110] sm:$0xff] %vm215, %v645
      %828 = vst.msk [vmem:[%s145 + $0x118] sm:$0xff] %vm215, %v650
      %829 = vst.msk [vmem:[%s145 + $0x120] sm:$0xff] %vm215, %v655
      %830 = vst.msk [vmem:[%s145 + $0x128] sm:$0xff] %vm215, %v660
      %831 = vst.msk [vmem:[%s145 + $0x130] sm:$0xff] %vm215, %v665
      %832 = vst.msk [vmem:[%s145 + $0x138] sm:$0xff] %vm215, %v670
      %833 = vst.msk [vmem:[%s145 + $0x140] sm:$0xff] %vm215, %v675
      %834 = vst.msk [vmem:[%s145 + $0x148] sm:$0xff] %vm215, %v680
      %835 = vst.msk [vmem:[%s145 + $0x150] sm:$0xff] %vm215, %v685
      %836 = vst.msk [vmem:[%s145 + $0x158] sm:$0xff] %vm215, %v690
      %837 = vst.msk [vmem:[%s145 + $0x160] sm:$0xff] %vm215, %v695
      %838 = vst.msk [vmem:[%s145 + $0x168] sm:$0xff] %vm215, %v700
      %839 = vst.msk [vmem:[%s145 + $0x170] sm:$0xff] %vm215, %v705
      %840 = vst.msk [vmem:[%s145 + $0x178] sm:$0xff] %vm215, %v710
      %841 = vst.msk [vmem:[%s145 + $0x180] sm:$0xff] %vm215, %v715
      %842 = vst.msk [vmem:[%s145 + $0x188] sm:$0xff] %vm215, %v720
      %843 = vst.msk [vmem:[%s145 + $0x190] sm:$0xff] %vm215, %v725
      %844 = vst.msk [vmem:[%s145 + $0x198] sm:$0xff] %vm215, %v730
      %845 = vst.msk [vmem:[%s145 + $0x1a0] sm:$0xff] %vm215, %v735
      %846 = vst.msk [vmem:[%s145 + $0x1a8] sm:$0xff] %vm215, %v740
      %847 = vst.msk [vmem:[%s145 + $0x1b0] sm:$0xff] %vm215, %v745
      %848 = vst.msk [vmem:[%s145 + $0x1b8] sm:$0xff] %vm215, %v750
      %849 = vst.msk [vmem:[%s145 + $0x1c0] sm:$0xff] %vm215, %v755
      %850 = vst.msk [vmem:[%s145 + $0x1c8] sm:$0xff] %vm215, %v760
      %851 = vst.msk [vmem:[%s145 + $0x1d0] sm:$0xff] %vm215, %v765
      %852 = vst.msk [vmem:[%s145 + $0x1d8] sm:$0xff] %vm215, %v770
      %853 = vst.msk [vmem:[%s145 + $0x1e0] sm:$0xff] %vm215, %v775
      %854 = vst.msk [vmem:[%s145 + $0x1e8] sm:$0xff] %vm215, %v780
      %855 = vst.msk [vmem:[%s145 + $0x1f0] sm:$0xff] %vm215, %v785
      %856 = vst.msk [vmem:[%s145 + $0x1f8] sm:$0xff] %vm215, %v790
      %s857 = smul.u32 64, %s13
      %p858 = scmp.lt.s32.totalorder %s857, 127
      %s859 = scalar_select %p858, %s857, 127
      %s860 = smul.addr %s859, 8
      %s861 = scalar_lea.vmem %s2, %s860
      // Predicated region
      $region29: #{tpu_custom_call.1} parent=27 // pred_check
        %p862 = pneg %p78
      $region30: #{tpu_custom_call.1} parent=27 // pred_check_branch
        %864 = sbr.rel (%p862) target = $region32
      $region31: #{tpu_custom_call.1} parent=27 // pred_region
        %s865 = smul.u32 64, %s13
      $region32: #{tpu_custom_call.1} parent=27 // pred_fallthru
        _
    $region28: #{tpu_custom_call.1} parent=5 // pred_fallthru
      _
    %p866 = scmp.le.s32.totalorder 2, %s8
    // Predicated region
    $region33: #{tpu_custom_call.1} parent=5 // pred_check
      %p867 = pneg %p866
    $region34: #{tpu_custom_call.1} parent=5 // pred_check_branch
      %869 = sbr.rel (%p867) target = $region36
    $region35: #{tpu_custom_call.1} parent=5 // pred_region
      %s870 = ssub.s32 %s8, 2
      // Predicated region
      $region37: #{tpu_custom_call.1} parent=35 // pred_check
        %p871 = pneg %p84
      $region38: #{tpu_custom_call.1} parent=35 // pred_check_branch
        %873 = sbr.rel (%p871) target = $region40
      $region39: #{tpu_custom_call.1} parent=35 // pred_region
        %s874 = smul.u32 64, %s14
        %p875 = scmp.lt.s32.totalorder %s874, 127
        %s876 = scalar_select %p875, %s874, 127
        %s877 = smul.addr %s876, 8
        %s878 = scalar_lea.vmem %s2, %s877
      $region40: #{tpu_custom_call.1} parent=35 // pred_fallthru
        _
    $region36: #{tpu_custom_call.1} parent=5 // pred_fallthru
      _
  $region6: #{tpu_custom_call.1} parent=0 // loop_footer
    %s12 = sadd.s32 1, %s8
  $region7: #{tpu_custom_call.1} parent=0 // loop_footer_branch
    %7 = sbr.rel target = $region3
  $region8: #{tpu_custom_call.1} parent=0 // loop_exit
    _

</llo_original>
